<compile_context>
chip_gen: v6e
topology: v6e:2x2x1
jax: 0.10.0
libtpu: 0.0.40
codegen_flags: <defaults>
</compile_context>

<pallas_src>
import functools

import jax
import jax.numpy as jnp
from jax.experimental import pallas as pl
from jax.experimental.pallas import tpu as pltpu


# ----------------------------------------------------------------------------
# Path A: tiled one-hot scan over the full class axis (moderate C).
# ----------------------------------------------------------------------------
def _ce_scan_kernel(probs_ref, tgt_ref, out_ref, pt_acc_ref, *,
                    n_rows: int, block_n: int, block_c: int):
    i = pl.program_id(0)          # row-block index ("parallel")
    k = pl.program_id(1)          # class-block index (reduction, innermost)
    num_k = pl.num_programs(1)

    @pl.when(k == 0)
    def _():
        pt_acc_ref[...] = jnp.zeros_like(pt_acc_ref)

    probs = probs_ref[...]                             # NATIVE dtype, no full-tile upcast
    # Shift the (TN,1) target by this C-tile's origin instead of adding k*TC to
    # the full (TN,TC) iota (saves one full-tile int32 VALU add per step).
    local_tgt = tgt_ref[...] - k * block_c             # (TN, 1) int32
    col = jax.lax.broadcasted_iota(jnp.int32, probs.shape, dimension=1)
    sel = jnp.where(col == local_tgt, probs, 0.0)      # select in native dtype
    # One nonzero per row per tile -> f32-accumulated lane reduce is exact.
    pt_acc_ref[...] += jnp.sum(sel, axis=-1, keepdims=True, dtype=jnp.float32)

    @pl.when(k == num_k - 1)
    def _():
        pt = pt_acc_ref[...]                           # (TN, 1) f32
        row = jax.lax.broadcasted_iota(jnp.int32, pt.shape, dimension=0) + i * block_n
        # Rows beyond the true N (partial last row-block): Pt := 1 so -log2 == 0.
        pt_safe = jnp.where(row < n_rows, pt, 1.0)
        out_ref[...] = -jnp.log2(pt_safe)              # per-row loss


def _choose_scan_tiles(n: int, c: int, itemsize: int) -> tuple[int, int]:
    # Size tiles by bytes: target ~16 MiB per probs buffer (1024x4096 f32,
    # 1024x8192 bf16).  2 buffers + lane-padded target/out/scratch stay under
    # ~40 MiB -> fits v7x's 64 MiB physical VMEM and v5e/v6e's 128 MiB.
    target_bytes = 16 * 1024 * 1024
    block_n = n if n <= 1024 else 1024                 # full dim or multiple of 8
    if block_n * c * itemsize <= target_bytes:
        block_c = c                                    # full class axis fits
    else:
        bc = target_bytes // (block_n * itemsize)
        block_c = max(128, (bc // 128) * 128)          # multiple of 128 lanes
    return block_n, block_c


def _cross_entropy_scan(probs: jax.Array, tgt2d: jax.Array, n: int, c: int) -> jax.Array:
    itemsize = jnp.dtype(probs.dtype).itemsize
    block_n, block_c = _choose_scan_tiles(n, c, itemsize)
    grid = (pl.cdiv(n, block_n), pl.cdiv(c, block_c))

    # VMEM accounting: (TN,1) int32/f32 blocks pad to 128 lanes in VMEM.
    probs_buf = block_n * block_c * itemsize
    narrow_buf = block_n * 128 * 4
    vmem_limit = (2 * probs_buf          # double-buffered probs tiles
                  + 2 * narrow_buf       # target (TN,1) blocks
                  + 2 * narrow_buf       # per-row loss output blocks
                  + narrow_buf           # pt accumulator scratch
                  + (4 << 20))           # slack
    vmem_limit = int(min(max(vmem_limit, 16 << 20), 50 << 20))

    cost = pl.CostEstimate(
        flops=2 * n * c,                               # compare + select/add
        transcendentals=n,                             # one log2 per row
        bytes_accessed=n * c * itemsize + n * 4 + n * 4,
    )

    kernel = functools.partial(_ce_scan_kernel, n_rows=n,
                               block_n=block_n, block_c=block_c)
    return pl.pallas_call(
        kernel,
        out_shape=jax.ShapeDtypeStruct((n, 1), jnp.float32),
        grid=grid,
        in_specs=[
            pl.BlockSpec((block_n, block_c), lambda i, k: (i, k)),   # probs tile
            pl.BlockSpec((block_n, 1), lambda i, k: (i, 0)),         # target tile
        ],
        out_specs=pl.BlockSpec((block_n, 1), lambda i, k: (i, 0)),   # per-row loss
        scratch_shapes=[pltpu.VMEM((block_n, 1), jnp.float32)],      # Pt accumulator
        compiler_params=pltpu.CompilerParams(
            # Row blocks are independent -> "parallel" (v7x megacore);
            # class axis feeds the Pt accumulator -> "arbitrary".
            dimension_semantics=("parallel", "arbitrary"),
            vmem_limit_bytes=vmem_limit,
        ),
        cost_estimate=cost,
    )(probs, tgt2d)


# ----------------------------------------------------------------------------
# Path B: scalar-prefetch gather for vocab-scale C (only the 128-lane tile
# containing each row's target class is DMA'd from HBM).
# ----------------------------------------------------------------------------
def _ce_gather_kernel(tgt_sm, tgt_ref, probs_hbm, out_ref, buf, sems, *,
                      n_rows: int, block_n: int, lane: int):
    i = pl.program_id(0)
    base = i * block_n

    def _copy(j, src_row, src_col):
        return pltpu.make_async_copy(
            probs_hbm.at[pl.ds(src_row, 1), pl.ds(src_col, lane)],
            buf.at[pl.ds(j, 1), pl.ds(0, lane)],
            sems.at[j])

    # Issue one small DMA per row (unrolled: block_n is small & static), then wait.
    for j in range(block_n):
        row = jnp.minimum(base + j, n_rows - 1)        # clamp padded rows -> valid DMA
        col = (tgt_sm[row] // lane) * lane             # aligned tile holding the target
        col = pl.multiple_of(col, lane)
        _copy(j, row, col).start()
    for j in range(block_n):
        _copy(j, 0, 0).wait()                          # same shape => same byte count

    tgt = tgt_ref[...]                                 # (block_n, 1) int32
    local = jnp.bitwise_and(tgt, lane - 1)             # target's lane within its tile
    col_iota = jax.lax.broadcasted_iota(jnp.int32, buf.shape, dimension=1)
    pt = jnp.sum(jnp.where(col_iota == local, buf[...], 0.0),
                 axis=-1, keepdims=True, dtype=jnp.float32)    # (block_n, 1)
    row_iota = jax.lax.broadcasted_iota(jnp.int32, pt.shape, dimension=0) + base
    pt_safe = jnp.where(row_iota < n_rows, pt, 1.0)
    out_ref[...] = -jnp.log2(pt_safe)


def _cross_entropy_gather(probs: jax.Array, tgt2d: jax.Array, n: int, c: int) -> jax.Array:
    itemsize = jnp.dtype(probs.dtype).itemsize
    lane = 128
    block_n = n if n < 8 else 8
    num_i = pl.cdiv(n, block_n)
    tgt_flat = jnp.reshape(tgt2d, (n,))

    kernel = functools.partial(_ce_gather_kernel, n_rows=n, block_n=block_n, lane=lane)
    grid_spec = pltpu.PrefetchScalarGridSpec(
        num_scalar_prefetch=1,                          # target (N,) -> SMEM
        grid=(num_i,),
        in_specs=[
            pl.BlockSpec((block_n, 1), lambda i, tgt: (i, 0)),   # target (VMEM, vector use)
            pl.BlockSpec(memory_space=pl.ANY),                   # probs stays in HBM
        ],
        out_specs=pl.BlockSpec((block_n, 1), lambda i, tgt: (i, 0)),
        scratch_shapes=[
            pltpu.VMEM((block_n, lane), probs.dtype),            # gathered lane tiles
            pltpu.SemaphoreType.DMA((block_n,)),
        ])
    cost = pl.CostEstimate(
        flops=2 * n * lane,
        transcendentals=n,
        bytes_accessed=n * (lane * itemsize + 8) + n * 4,
    )
    return pl.pallas_call(
        kernel,
        out_shape=jax.ShapeDtypeStruct((n, 1), jnp.float32),
        grid_spec=grid_spec,
        compiler_params=pltpu.CompilerParams(
            dimension_semantics=("parallel",),
        ),
        cost_estimate=cost,
    )(tgt_flat, tgt2d, probs)


# ----------------------------------------------------------------------------
# Public wrapper.
# ----------------------------------------------------------------------------
def cross_entropy(probs: jax.Array, target: jax.Array, reduction: str = "mean",
                  *, min_gather_classes: int = 131072) -> jax.Array:
    """Pallas TPU equivalent of the PyTorch CrossEntropy.forward.

    probs:  (N, C) probabilities, any float dtype (read in native dtype).
    target: (N,) or (N, 1) integer class indices.
    Returns a scalar float32.
    """
    assert reduction in ("mean", "sum")
    n, c = probs.shape
    tgt2d = jnp.reshape(target, (n, 1)).astype(jnp.int32)

    # Vocab-scale C: gather only the 128-lane tile holding each row's target
    # (HBM traffic ~N*128*itemsize instead of N*C*itemsize).  Break-even is
    # roughly where C*itemsize/HBM_BW exceeds the per-row overhead.
    use_gather = (c % 128 == 0) and (c >= min_gather_classes)
    if use_gather:
        per_row = _cross_entropy_gather(probs, tgt2d, n, c)
    else:
        per_row = _cross_entropy_scan(probs, tgt2d, n, c)

    total = jnp.sum(per_row[:, 0])                    # tiny wrapper-side reduce
    if reduction == "mean":
        total = total / jnp.float32(n)                # divide by the TRUE N
    return total


if __name__ == "__main__":
    key = jax.random.PRNGKey(0)
    k1, k2, k3, k4 = jax.random.split(key, 4)

    # --- scan path, f32, mean & sum -------------------------------------------------
    N, C = 8, 32
    logits = jax.random.normal(k1, (N, C), dtype=jnp.float32)
    probs = jax.nn.softmax(logits, axis=-1)                    # valid probabilities
    target = jax.random.randint(k2, (N, 1), 0, C, dtype=jnp.int32)
    pt_ref = probs[jnp.arange(N), target.squeeze()]

    loss_mean = cross_entropy(probs, target, reduction="mean")
    jax.block_until_ready(loss_mean)
    ref_mean = jnp.mean(-jnp.log2(pt_ref))
    assert jnp.allclose(loss_mean, ref_mean, rtol=1e-5, atol=1e-5), (loss_mean, ref_mean)

    loss_sum = cross_entropy(probs, target, reduction="sum")
    jax.block_until_ready(loss_sum)
    ref_sum = jnp.sum(-jnp.log2(pt_ref))
    assert jnp.allclose(loss_sum, ref_sum, rtol=1e-5, atol=1e-5), (loss_sum, ref_sum)

    # --- scan path, native bf16 (no wrapper-side astype; select in bf16) ------------
    probs_bf16 = probs.astype(jnp.bfloat16)
    loss_bf16 = cross_entropy(probs_bf16, target, reduction="mean")
    jax.block_until_ready(loss_bf16)
    pt_bf16 = probs_bf16[jnp.arange(N), target.squeeze()].astype(jnp.float32)
    ref_bf16 = jnp.mean(-jnp.log2(pt_bf16))
    assert jnp.allclose(loss_bf16, ref_bf16, rtol=1e-4, atol=1e-4), (loss_bf16, ref_bf16)

    # --- gather path (scalar-prefetch + per-row DMA), forced at small shapes --------
    Ng, Cg = 24, 512                                   # Cg % 128 == 0
    logits_g = jax.random.normal(k3, (Ng, Cg), dtype=jnp.float32)
    probs_g = jax.nn.softmax(logits_g, axis=-1)
    target_g = jax.random.randint(k4, (Ng, 1), 0, Cg, dtype=jnp.int32)
    loss_g = cross_entropy(probs_g, target_g, reduction="mean", min_gather_classes=0)
    jax.block_until_ready(loss_g)
    pt_g = probs_g[jnp.arange(Ng), target_g.squeeze()]
    ref_g = jnp.mean(-jnp.log2(pt_g))
    assert jnp.allclose(loss_g, ref_g, rtol=1e-5, atol=1e-5), (loss_g, ref_g)

    print("KERNEL_OK")
</pallas_src>

<mosaic_0001>
module attributes {stable_mosaic.version = 11 : i64} {
  func.func @_ce_scan_kernel(%arg0: i32, %arg1: i32, %arg2: memref<8x32xf32, #tpu.memory_space<vmem>>, %arg3: memref<8x1xi32, #tpu.memory_space<vmem>>, %arg4: memref<8x1xf32, #tpu.memory_space<vmem>>, %arg5: memref<8x1xf32, #tpu.memory_space<vmem>>) attributes {dimension_semantics = [#tpu.dimension_semantics<parallel>, #tpu.dimension_semantics<arbitrary>], iteration_bounds = array<i64: 1, 1>, scalar_prefetch = 0 : i64, scratch_operands = 1 : i64, tpu.core_type = #tpu.core_type<tc>, window_params = [{transform_indices = @transform_0, window_bounds = array<i64: 8, 32>}, {transform_indices = @transform_1, window_bounds = array<i64: 8, 1>}, {transform_indices = @transform_2, window_bounds = array<i64: 8, 1>}]} {
    %c0_i32 = arith.constant 0 : i32
    %0 = arith.cmpi eq, %arg1, %c0_i32 : i32
    %1 = arith.extui %0 : i1 to i32
    %c0_i32_0 = arith.constant 0 : i32
    %2 = arith.cmpi ne, %1, %c0_i32_0 : i32
    scf.if %2 {
      %cst_11 = arith.constant 0.000000e+00 : f32
      %21 = vector.broadcast %cst_11 : f32 to vector<8x1xf32>
      %c0_12 = arith.constant 0 : index
      %c0_13 = arith.constant 0 : index
      %22 = vector.load %arg5[%c0_12, %c0_13] : memref<8x1xf32, #tpu.memory_space<vmem>>, vector<8x1xf32>
      tpu.vector_store %arg5[%c0_12, %c0_13], %21 {strides = array<i32>} : memref<8x1xf32, #tpu.memory_space<vmem>>, vector<8x1xf32>,
    } else {
    }
    %c0 = arith.constant 0 : index
    %c0_1 = arith.constant 0 : index
    %3 = vector.load %arg2[%c0, %c0_1] : memref<8x32xf32, #tpu.memory_space<vmem>>, vector<8x32xf32>
    %c0_2 = arith.constant 0 : index
    %c0_3 = arith.constant 0 : index
    %4 = vector.load %arg3[%c0_2, %c0_3] : memref<8x1xi32, #tpu.memory_space<vmem>>, vector<8x1xi32>
    %c32_i32 = arith.constant 32 : i32
    %5 = arith.muli %arg1, %c32_i32 : i32
    %6 = vector.broadcast %5 : i32 to vector<8x1xi32>
    %7 = arith.subi %4, %6 : vector<8x1xi32>
    %8 = tpu.iota {dimensions = array<i32: 1>} : vector<8x32xi32>
    %9 = vector.broadcast %7 : vector<8x1xi32> to vector<8x32xi32>
    %10 = arith.cmpi eq, %8, %9 : vector<8x32xi32>
    %cst = arith.constant 0.000000e+00 : f32
    %11 = vector.broadcast %cst : f32 to vector<8x32xf32>
    %12 = arith.select %10, %3, %11 : vector<8x32xi1>, vector<8x32xf32>
    %c0_4 = arith.constant 0 : index
    %c0_5 = arith.constant 0 : index
    %13 = vector.load %arg5[%c0_4, %c0_5] : memref<8x1xf32, #tpu.memory_space<vmem>>, vector<8x1xf32>
    %cst_6 = arith.constant dense<0.000000e+00> : vector<8xf32>
    %14 = vector.multi_reduction <add>, %12, %cst_6 [1] : vector<8x32xf32> to vector<8xf32>
    %15 = vector.shape_cast %14 : vector<8xf32> to vector<8x1xf32>
    %16 = arith.addf %13, %15 : vector<8x1xf32>
    %c0_7 = arith.constant 0 : index
    %c0_8 = arith.constant 0 : index
    %17 = vector.load %arg5[%c0_7, %c0_8] : memref<8x1xf32, #tpu.memory_space<vmem>>, vector<8x1xf32>
    tpu.vector_store %arg5[%c0_7, %c0_8], %16 {strides = array<i32>} : memref<8x1xf32, #tpu.memory_space<vmem>>, vector<8x1xf32>,
    %c0_i32_9 = arith.constant 0 : i32
    %18 = arith.cmpi eq, %arg1, %c0_i32_9 : i32
    %19 = arith.extui %18 : i1 to i32
    %c0_i32_10 = arith.constant 0 : i32
    %20 = arith.cmpi ne, %19, %c0_i32_10 : i32
    scf.if %20 {
      %c0_11 = arith.constant 0 : index
      %c0_12 = arith.constant 0 : index
      %21 = vector.load %arg5[%c0_11, %c0_12] : memref<8x1xf32, #tpu.memory_space<vmem>>, vector<8x1xf32>
      %22 = tpu.iota {dimensions = array<i32: 0>} : vector<8x1xi32>
      %c8_i32 = arith.constant 8 : i32
      %23 = arith.muli %arg0, %c8_i32 : i32
      %24 = vector.broadcast %23 : i32 to vector<8x1xi32>
      %25 = arith.addi %22, %24 : vector<8x1xi32>
      %c8_i32_13 = arith.constant 8 : i32
      %26 = vector.broadcast %c8_i32_13 : i32 to vector<8x1xi32>
      %27 = arith.cmpi slt, %25, %26 : vector<8x1xi32>
      %cst_14 = arith.constant 1.000000e+00 : f32
      %28 = vector.broadcast %cst_14 : f32 to vector<8x1xf32>
      %29 = arith.select %27, %21, %28 : vector<8x1xi1>, vector<8x1xf32>
      %30 = math.log %29 : vector<8x1xf32>
      %cst_15 = arith.constant 2.000000e+00 : f32
      %31 = math.log %cst_15 : f32
      %32 = vector.broadcast %31 : f32 to vector<8x1xf32>
      %33 = arith.divf %30, %32 : vector<8x1xf32>
      %cst_16 = arith.constant 0.000000e+00 : f32
      %34 = vector.broadcast %cst_16 : f32 to vector<8x1xf32>
      %35 = arith.subf %34, %33 : vector<8x1xf32>
      %c0_17 = arith.constant 0 : index
      %c0_18 = arith.constant 0 : index
      %36 = vector.load %arg4[%c0_17, %c0_18] : memref<8x1xf32, #tpu.memory_space<vmem>>, vector<8x1xf32>
      tpu.vector_store %arg4[%c0_17, %c0_18], %35 {strides = array<i32>} : memref<8x1xf32, #tpu.memory_space<vmem>>, vector<8x1xf32>,
    } else {
    }
    return
  }
  func.func @transform_0(%arg0: i32, %arg1: i32) -> (i32, i32) {
    %c0_i32 = arith.constant 0 : i32
    return %arg0, %arg1 : i32, i32
  }
  func.func @transform_1(%arg0: i32, %arg1: i32) -> (i32, i32) {
    %c0_i32 = arith.constant 0 : i32
    %c0_i32_0 = arith.constant 0 : i32
    return %arg0, %c0_i32 : i32, i32
  }
  func.func @transform_2(%arg0: i32, %arg1: i32) -> (i32, i32) {
    %c0_i32 = arith.constant 0 : i32
    %c0_i32_0 = arith.constant 0 : i32
    return %arg0, %c0_i32 : i32, i32
  }
}

</mosaic_0001>

<llo_original>
// kernel: tpu_custom_call.1
$region0: #{tpu_custom_call.1}
  #allocation0 [shape = 'u32[]', space=smem, size = 0x4, offset = 0x4, fixed_abs, tag = 'smem constant byte address 0x4 - core index']
  #allocation1 [shape = 'u32[144,128]{1,0:T(1,128)}', space=vmem, size = 0x12000, scoped, tag = 'internal scratch']
  #allocation2 [shape = 'f32[8,1]{1,0:T(8,128)}', space=vmem, size = 0x1000, scoped, tag = 'scratch operand']
  %s0 = inlined_call_operand.vmem [shape: f32[8,32], index: 0, kind: input, shape index: {}]
  %s1 = inlined_call_operand.vmem [shape: s32[8,1], index: 1, kind: input, shape index: {}]
  %s2 = inlined_call_operand.vmem [shape: f32[8,1], index: 2, kind: output, shape index: {}]
  %s3 = sld [smem:[#allocation0]]
  $region26: #{tpu_custom_call.1} parent=0
    _
  %s5 = ssub.s32 1, %s3
  %s6 = scalar_select 0, %s5, %s3
  // Predicated region
  $region2: #{tpu_custom_call.1} parent=0 // pred_check
    _
  $region3: #{tpu_custom_call.1} parent=0 // pred_check_branch
    %8 = sbr.rel (0) target = $region5
  $region4: #{tpu_custom_call.1} parent=0 // pred_region
    _
  $region5: #{tpu_custom_call.1} parent=0 // pred_fallthru
    _
  // Predicated region
  $region6: #{tpu_custom_call.1} parent=0 // pred_check
    _
  $region7: #{tpu_custom_call.1} parent=0 // pred_check_branch
    %10 = sbr.rel (0) target = $region9
  $region8: #{tpu_custom_call.1} parent=0 // pred_region
    _
  $region9: #{tpu_custom_call.1} parent=0 // pred_fallthru
    _
  %p11 = scmp.eq.s32.totalorder 0, 0
  // Predicated region
  $region10: #{tpu_custom_call.1} parent=0 // pred_check
    %p12 = pneg %p11
  $region11: #{tpu_custom_call.1} parent=0 // pred_check_branch
    %14 = sbr.rel (%p12) target = $region13
  $region12: #{tpu_custom_call.1} parent=0 // pred_region
    %vm15 = vcmask 7168
    %16 = vst.msk [vmem:[#allocation2] sm:$0xff] %vm15, 0.0
  $region13: #{tpu_custom_call.1} parent=0 // pred_fallthru
    _
  %v17 = vld [vmem:[%s0] sm:$0xff]
  %v18 = vld [vmem:[%s1] sm:$0xff]
  %s19 = smul.u32 0, 32
  %v20 = vstv %s19
  %v21 = vsub.s32 %v18, %v20
  %v22 = vlaneseq
  %v23 = vand.u32 %v22, 127
  %24 = vset.pattern.permute.xlu0 0
  %25 = vperm.xlu0 %24, %v21
  %v26 = vpop.permute.xlu0 %25
  %vm27 = vcmp.eq.s32.totalorder %v23, %v26
  %v28 = vsel %vm27, %v17, 0.0
  %v29 = vld [vmem:[#allocation2] sm:$0xff]
  %vm30 = vcmask 261120
  %v31 = vsel %vm30, %v28, 0.0
  %32 = vadd.xlane.f32.xlu0 %v31
  %v33 = vpop.xlane.xlu0 %32
  %v34 = vadd.f32 %v29, %v33
  %vm35 = vcmask 7168
  %36 = vst.msk [vmem:[#allocation2] sm:$0xff] %vm35, %v34
  // Predicated region
  $region14: #{tpu_custom_call.1} parent=0 // pred_check
    %p37 = pneg %p11
  $region15: #{tpu_custom_call.1} parent=0 // pred_check_branch
    %39 = sbr.rel (%p37) target = $region17
  $region16: #{tpu_custom_call.1} parent=0 // pred_region
    %v40 = vld [vmem:[#allocation2] sm:$0xff]
    %v41 = vlaneseq
    %v42 = vshrl.u32 %v41, 7
    %s43 = smul.u32 0, 8
    %v44 = vstv %s43
    %v45 = vadd.s32 %v42, %v44
    %vm46 = vcmp.lt.s32.totalorder %v45, 8
    %v47 = vsel %vm46, %v40, 1.0
    %v48 = vlog2.pop %v47
    %v49 = vmul.f32 %v48, 0.6931472
    %v50 = vrcp.pop 0.6931472
    %v51 = vmul.f32 %v49, %v50
    %v52 = vsub.f32 0.0, %v51
    %53 = vst.msk [vmem:[%s2] sm:$0xff] %vm35, %v52
  $region17: #{tpu_custom_call.1} parent=0 // pred_fallthru
    _
  // Predicated region
  $region18: #{tpu_custom_call.1} parent=0 // pred_check
    _
  $region19: #{tpu_custom_call.1} parent=0 // pred_check_branch
    %55 = sbr.rel (0) target = $region21
  $region20: #{tpu_custom_call.1} parent=0 // pred_region
    _
  $region21: #{tpu_custom_call.1} parent=0 // pred_fallthru
    _
  // Predicated region
  $region22: #{tpu_custom_call.1} parent=0 // pred_check
    _
  $region23: #{tpu_custom_call.1} parent=0 // pred_check_branch
    %57 = sbr.rel (0) target = $region25
  $region24: #{tpu_custom_call.1} parent=0 // pred_region
    _
  $region25: #{tpu_custom_call.1} parent=0 // pred_fallthru
    _

</llo_original>
